<compile_context>
chip_gen: v7x
topology: tpu7x:2x2x1
jax: 0.10.0
libtpu: 0.0.40
codegen_flags: <defaults>
</compile_context>

<pallas_src>
import functools
import math

import numpy as np

import jax
import jax.numpy as jnp
from jax.experimental import pallas as pl
from jax.experimental.pallas import tpu as pltpu

_MIB = 1024 * 1024


def _round_up(x: int, m: int) -> int:
    return ((x + m - 1) // m) * m


def _sublane_multiple(dtype) -> int:
    itemsize = np.dtype(dtype).itemsize
    return (32 // itemsize) if itemsize in (1, 2, 4) else 8


def _padded_row_bytes(c: int, dtype) -> int:
    """Physical VMEM bytes per lane-column of a (C, lane_tile) block."""
    itemsize = np.dtype(dtype).itemsize
    return _round_up(max(c, 1), _sublane_multiple(dtype)) * itemsize


def _pce_kernel(x_ref, t_ref, out_ref, *, s_total, lane_tile, n_inner, needs_mask):
    """Block shapes:
         x_ref, t_ref : (1, C, lane_tile)  -- C on sublanes, spatial on lanes
         out_ref      : (1, 1, lane_tile)  -- per-lane partial loss sums,
                                              resident across the inner axis
    """
    i = pl.program_id(2)

    @pl.when(i == 0)
    def _init():
        out_ref[...] = jnp.zeros_like(out_ref)

    x = x_ref[...].astype(jnp.float32)   # (1, C, T)
    t = t_ref[...].astype(jnp.float32)   # (1, C, T)

    # -log_softmax(x)[c] = m + lse - x[c]   (stable)
    # per-column loss    = sum_c t*(m + lse - x) = (m + lse)*sum_c(t) - sum_c(t*x)
    m = jnp.max(x, axis=1, keepdims=True)                            # (1,1,T)
    lse = jnp.log(jnp.sum(jnp.exp(x - m), axis=1, keepdims=True))    # (1,1,T)
    sum_t = jnp.sum(t, axis=1, keepdims=True)                        # (1,1,T)
    sum_tx = jnp.sum(t * x, axis=1, keepdims=True)                   # (1,1,T)
    col_loss = (m + lse) * sum_t - sum_tx                            # (1,1,T)

    if needs_mask:
        # Zero columns past the true spatial extent (padded tail and clamped
        # phantom blocks).  One (1,1,T) iota + one where on the final
        # per-column loss is sufficient: all reductions above are per-column,
        # so NaN/Inf garbage in padded lanes stays confined to masked columns.
        p = pl.program_id(1)
        blk = p * n_inner + i
        col = jax.lax.broadcasted_iota(jnp.int32, col_loss.shape, dimension=2)
        valid = (blk * lane_tile + col) < s_total
        col_loss = jnp.where(valid, col_loss, 0.0)

    out_ref[...] += col_loss


def pseudo_cross_entropy_loss(x, target, dim: int = 1, *, lane_tile=None, n_par=None):
    """Pallas equivalent of PseudoCrossEntropyLoss.forward."""
    assert x.shape == target.shape
    ndim = x.ndim
    dim = dim % ndim
    c = x.shape[dim]
    b_pre = math.prod(x.shape[:dim]) if dim > 0 else 1
    s = math.prod(x.shape[dim + 1:]) if dim + 1 < ndim else 1
    n_positions = b_pre * s

    if s == 1:
        # Degenerate layout (softmax axis is last): the lane axis would be
        # width-1 (1/128 utilization), so use plain XLA for this rare case.
        # TODO(synk): dedicated Pallas path with C on lanes + XLU lane reduce.
        logp = jax.nn.log_softmax(x.astype(jnp.float32), axis=dim)
        return jnp.mean(jnp.sum(-logp * target.astype(jnp.float32), axis=dim))

    # Free reshape (no transpose): the softmax axis stays in place.
    x3 = x.reshape(b_pre, c, s)
    t3 = target.reshape(b_pre, c, s)

    # ---- Block sizing: byte-budgeted, dtype- and sublane-padding-aware. ----
    try:
        vmem_cap = int(pltpu.get_tpu_info().vmem_capacity_bytes)
    except Exception:
        vmem_cap = 64 * _MIB
    # Scoped-VMEM budget for this kernel: 48 MiB on >=64 MiB parts, never more
    # than 3/4 of physical VMEM.
    vmem_limit = int(min(48 * _MIB, (vmem_cap * 3) // 4))
    block_budget = max(4 * _MIB, vmem_limit - 12 * _MIB)   # pipeline buffers only

    # Physical VMEM bytes per lane-column held live at once:
    #   2 pipeline buffers per input block (sublane-padded rows) +
    #   2 buffers of the f32 accumulator row (padded to 8 sublanes).
    per_lane_vmem = (2 * (_padded_row_bytes(c, x.dtype) + _padded_row_bytes(c, target.dtype))
                     + 2 * 8 * 4)
    lane_cap_vmem = block_budget // per_lane_vmem
    # >~4 MiB of logical HBM bytes per input block has diminishing returns.
    lane_cap_hbm = (4 * _MIB) // max(1, c * np.dtype(x.dtype).itemsize)
    lane_cap = max(128, (min(lane_cap_vmem, lane_cap_hbm) // 128) * 128)
    if lane_tile is None:
        lane_tile = min(_round_up(s, 128), lane_cap)
    assert lane_tile % 128 == 0

    n_blocks = -(-s // lane_tile)
    if n_par is None:
        # Second "parallel" grid axis so both v7x TensorCores get work even
        # when b_pre is small; harmless on single-TC chips.
        n_par = 2 if n_blocks >= 2 else 1
    n_par = max(1, min(n_par, n_blocks))
    n_inner = -(-n_blocks // n_par)
    needs_mask = (n_par * n_inner * lane_tile) != s

    last_block = n_blocks - 1
    if n_par * n_inner == n_blocks:
        def in_map(o, p, i):
            return (o, 0, p * n_inner + i)
    else:
        # Phantom trailing blocks re-read the last real block; the in-kernel
        # mask zeroes their contribution.
        def in_map(o, p, i):
            return (o, 0, jnp.minimum(p * n_inner + i, last_block))

    kernel = functools.partial(
        _pce_kernel, s_total=s, lane_tile=lane_tile, n_inner=n_inner,
        needs_mask=needs_mask)

    in_bytes = x3.size * x3.dtype.itemsize + t3.size * t3.dtype.itemsize
    out_bytes = b_pre * n_par * lane_tile * 4
    cost = pl.CostEstimate(
        flops=6 * x3.size,
        transcendentals=x3.size + n_positions,   # exp per element, log per column
        bytes_accessed=int(in_bytes + out_bytes))

    partial_sums = pl.pallas_call(
        kernel,
        out_shape=jax.ShapeDtypeStruct((b_pre * n_par, 1, lane_tile), jnp.float32),
        grid_spec=pltpu.PrefetchScalarGridSpec(
            num_scalar_prefetch=0,
            grid=(b_pre, n_par, n_inner),
            in_specs=[
                pl.BlockSpec((1, c, lane_tile), in_map),
                pl.BlockSpec((1, c, lane_tile), in_map),
            ],
            # Same output block across the inner axis -> resident lane-dense
            # vector accumulator; written back once per (o, p).
            out_specs=pl.BlockSpec((1, 1, lane_tile),
                                   lambda o, p, i: (o * n_par + p, 0, 0)),
        ),
        compiler_params=pltpu.CompilerParams(
            dimension_semantics=("parallel", "parallel", "arbitrary"),
            vmem_limit_bytes=vmem_limit),
        cost_estimate=cost,
    )(x3, t3)

    # Masked lanes contribute exactly 0.  Reciprocal computed in Python double
    # so very large position counts (>2^24) don't lose precision in f32.
    inv_count = 1.0 / float(n_positions)
    return jnp.sum(partial_sums) * jnp.float32(inv_count)


def _reference(x, target, dim=1):
    logp = jax.nn.log_softmax(x.astype(jnp.float32), axis=dim)
    loss = jnp.sum(-logp * target.astype(jnp.float32), axis=dim)
    return jnp.mean(loss)


if __name__ == "__main__":
    key = jax.random.PRNGKey(0)
    k1, k2, k3, k4 = jax.random.split(key, 4)

    # 1) Canonical NCHW input, dim=1, soft-label target (single lane block).
    N, C, H, W = 2, 4, 16, 16
    x = jax.random.normal(k1, (N, C, H, W), dtype=jnp.float32)
    target = jax.nn.softmax(
        jax.random.normal(k2, (N, C, H, W), dtype=jnp.float32), axis=1)
    loss = jax.block_until_ready(pseudo_cross_entropy_loss(x, target, dim=1))
    ref = _reference(x, target, dim=1)
    assert jnp.allclose(loss, ref, rtol=1e-5, atol=1e-5), (loss, ref)

    # 2) Non-divisible spatial extent with forced small tiles: exercises the
    #    2-way parallel spatial split, the phantom-block clamp and tail mask.
    x2 = jax.random.normal(k3, (2, 4, 10, 30), dtype=jnp.float32)
    t2 = jax.nn.softmax(
        jax.random.normal(k4, (2, 4, 10, 30), dtype=jnp.float32), axis=1)
    loss2 = jax.block_until_ready(
        pseudo_cross_entropy_loss(x2, t2, dim=1, lane_tile=128, n_par=2))
    ref2 = _reference(x2, t2, dim=1)
    assert jnp.allclose(loss2, ref2, rtol=1e-5, atol=1e-5), (loss2, ref2)

    # 3) Degenerate dim == last axis (S == 1) fallback path.
    xl = jax.random.normal(k1, (3, 8), dtype=jnp.float32)
    tl = jax.nn.softmax(jax.random.normal(k2, (3, 8), dtype=jnp.float32), axis=-1)
    loss3 = jax.block_until_ready(pseudo_cross_entropy_loss(xl, tl, dim=-1))
    ref3 = _reference(xl, tl, dim=-1)
    assert jnp.allclose(loss3, ref3, rtol=1e-5, atol=1e-5), (loss3, ref3)

    print("KERNEL_OK")
</pallas_src>

<mosaic_0001>
module attributes {stable_mosaic.version = 11 : i64} {
  func.func @_pce_kernel(%arg0: i32, %arg1: i32, %arg2: i32, %arg3: memref<1x4x256xf32, #tpu.memory_space<vmem>>, %arg4: memref<1x4x256xf32, #tpu.memory_space<vmem>>, %arg5: memref<1x1x256xf32, #tpu.memory_space<vmem>>) attributes {dimension_semantics = [#tpu.dimension_semantics<parallel>, #tpu.dimension_semantics<parallel>, #tpu.dimension_semantics<arbitrary>], iteration_bounds = array<i64: 2, 1, 1>, scalar_prefetch = 0 : i64, scratch_operands = 0 : i64, tpu.core_type = #tpu.core_type<tc>, window_params = [{transform_indices = @transform_0, window_bounds = array<i64: 1, 4, 256>}, {transform_indices = @transform_1, window_bounds = array<i64: 1, 4, 256>}, {transform_indices = @transform_2, window_bounds = array<i64: 1, 1, 256>}]} {
    %c0_i32 = arith.constant 0 : i32
    %0 = arith.cmpi eq, %arg2, %c0_i32 : i32
    %1 = arith.extui %0 : i1 to i32
    %c0_i32_0 = arith.constant 0 : i32
    %2 = arith.cmpi ne, %1, %c0_i32_0 : i32
    scf.if %2 {
      %cst_15 = arith.constant 0.000000e+00 : f32
      %24 = vector.broadcast %cst_15 : f32 to vector<1x1x256xf32>
      %c0_16 = arith.constant 0 : index
      %c0_17 = arith.constant 0 : index
      %c0_18 = arith.constant 0 : index
      %25 = vector.load %arg5[%c0_16, %c0_17, %c0_18] : memref<1x1x256xf32, #tpu.memory_space<vmem>>, vector<1x1x256xf32>
      tpu.vector_store %arg5[%c0_16, %c0_17, %c0_18], %24 {strides = array<i32>} : memref<1x1x256xf32, #tpu.memory_space<vmem>>, vector<1x1x256xf32>,
    } else {
    }
    %c0 = arith.constant 0 : index
    %c0_1 = arith.constant 0 : index
    %c0_2 = arith.constant 0 : index
    %3 = vector.load %arg3[%c0, %c0_1, %c0_2] : memref<1x4x256xf32, #tpu.memory_space<vmem>>, vector<1x4x256xf32>
    %c0_3 = arith.constant 0 : index
    %c0_4 = arith.constant 0 : index
    %c0_5 = arith.constant 0 : index
    %4 = vector.load %arg4[%c0_3, %c0_4, %c0_5] : memref<1x4x256xf32, #tpu.memory_space<vmem>>, vector<1x4x256xf32>
    %cst = arith.constant dense<0xFF800000> : vector<1x256xf32>
    %5 = vector.multi_reduction <maximumf>, %3, %cst [1] : vector<1x4x256xf32> to vector<1x256xf32>
    %6 = vector.shape_cast %5 : vector<1x256xf32> to vector<1x1x256xf32>
    %7 = vector.broadcast %6 : vector<1x1x256xf32> to vector<1x4x256xf32>
    %8 = arith.subf %3, %7 : vector<1x4x256xf32>
    %9 = math.exp %8 : vector<1x4x256xf32>
    %cst_6 = arith.constant dense<0.000000e+00> : vector<1x256xf32>
    %10 = vector.multi_reduction <add>, %9, %cst_6 [1] : vector<1x4x256xf32> to vector<1x256xf32>
    %11 = vector.shape_cast %10 : vector<1x256xf32> to vector<1x1x256xf32>
    %12 = math.log %11 : vector<1x1x256xf32>
    %cst_7 = arith.constant dense<0.000000e+00> : vector<1x256xf32>
    %13 = vector.multi_reduction <add>, %4, %cst_7 [1] : vector<1x4x256xf32> to vector<1x256xf32>
    %14 = vector.shape_cast %13 : vector<1x256xf32> to vector<1x1x256xf32>
    %15 = arith.mulf %4, %3 : vector<1x4x256xf32>
    %cst_8 = arith.constant dense<0.000000e+00> : vector<1x256xf32>
    %16 = vector.multi_reduction <add>, %15, %cst_8 [1] : vector<1x4x256xf32> to vector<1x256xf32>
    %17 = vector.shape_cast %16 : vector<1x256xf32> to vector<1x1x256xf32>
    %18 = arith.addf %6, %12 : vector<1x1x256xf32>
    %19 = arith.mulf %18, %14 : vector<1x1x256xf32>
    %20 = arith.subf %19, %17 : vector<1x1x256xf32>
    %c0_9 = arith.constant 0 : index
    %c0_10 = arith.constant 0 : index
    %c0_11 = arith.constant 0 : index
    %21 = vector.load %arg5[%c0_9, %c0_10, %c0_11] : memref<1x1x256xf32, #tpu.memory_space<vmem>>, vector<1x1x256xf32>
    %22 = arith.addf %21, %20 : vector<1x1x256xf32>
    %c0_12 = arith.constant 0 : index
    %c0_13 = arith.constant 0 : index
    %c0_14 = arith.constant 0 : index
    %23 = vector.load %arg5[%c0_12, %c0_13, %c0_14] : memref<1x1x256xf32, #tpu.memory_space<vmem>>, vector<1x1x256xf32>
    tpu.vector_store %arg5[%c0_12, %c0_13, %c0_14], %22 {strides = array<i32>} : memref<1x1x256xf32, #tpu.memory_space<vmem>>, vector<1x1x256xf32>,
    return
  }
  func.func @transform_0(%arg0: i32, %arg1: i32, %arg2: i32) -> (i32, i32, i32) {
    %c1_i32 = arith.constant 1 : i32
    %0 = arith.muli %arg1, %c1_i32 : i32
    %1 = arith.addi %0, %arg2 : i32
    %c0_i32 = arith.constant 0 : i32
    %c0_i32_0 = arith.constant 0 : i32
    return %arg0, %c0_i32, %1 : i32, i32, i32
  }
  func.func @transform_1(%arg0: i32, %arg1: i32, %arg2: i32) -> (i32, i32, i32) {
    %c1_i32 = arith.constant 1 : i32
    %0 = arith.muli %arg1, %c1_i32 : i32
    %1 = arith.addi %0, %arg2 : i32
    %c0_i32 = arith.constant 0 : i32
    %c0_i32_0 = arith.constant 0 : i32
    return %arg0, %c0_i32, %1 : i32, i32, i32
  }
  func.func @transform_2(%arg0: i32, %arg1: i32, %arg2: i32) -> (i32, i32, i32) {
    %c1_i32 = arith.constant 1 : i32
    %0 = arith.muli %arg0, %c1_i32 : i32
    %1 = arith.addi %0, %arg1 : i32
    %c0_i32 = arith.constant 0 : i32
    %c0_i32_0 = arith.constant 0 : i32
    %c0_i32_1 = arith.constant 0 : i32
    return %1, %c0_i32, %c0_i32_0 : i32, i32, i32
  }
}

</mosaic_0001>

<llo_original>
// kernel: tpu_custom_call.1
$region0: #{tpu_custom_call.1}
  #allocation0 [shape = 'u32[]', space=smem, size = 0x4, offset = 0x4, fixed_abs, tag = 'smem constant byte address 0x4 - core index']
  #allocation1 [shape = 'u32[144,128]{1,0:T(1,128)}', space=vmem, size = 0x12000, scoped, tag = 'internal scratch']
  %s0 = inlined_call_operand.hbm [shape: f32[2,4,256], index: 0, kind: input, shape index: {}]
  %s1 = inlined_call_operand.hbm [shape: f32[2,4,256], index: 1, kind: input, shape index: {}]
  %s2 = inlined_call_operand.hbm [shape: f32[2,1,256], index: 2, kind: output, shape index: {}]
  %s3 = sld [smem:[#allocation0]]
  $region53: #{tpu_custom_call.1} parent=0
    _
  %s5 = ssub.s32 1, %s3
  %s6 = scalar_select 0, %s5, %s3
  $region1: #{tpu_custom_call.1} parent=0
    #allocation2 [shape = 'u8[8192]{0}', space=vmem, size = 0x2000, scoped, tag = 'input window, operand 0']
    #allocation3 [shape = 's32[2]{0}', space=sflag, size = 0x8, scoped, tag = 'scoped memory for tpu_custom_call.1']
    #allocation4 [shape = 's32[2]{0}', space=sflag, size = 0x8, scoped, tag = 'scoped memory for tpu_custom_call.1']
    #allocation5 [shape = 'u8[8192]{0}', space=vmem, size = 0x2000, scoped, tag = 'input window, operand 1']
    #allocation6 [shape = 's32[2]{0}', space=sflag, size = 0x8, scoped, tag = 'scoped memory for tpu_custom_call.1']
    #allocation7 [shape = 'u8[2048]{0}', space=vmem, size = 0x800, scoped, tag = 'output window, operand 0']
    %7 = vsyncpa [#allocation3], 0
    %s8 = scalar_lea.sflag [#allocation3], 1
    %9 = vsyncpa %s8, 0
    %10 = vsyncpa [#allocation6], 0
    %s11 = scalar_lea.sflag [#allocation6], 1
    %12 = vsyncpa %s11, 0
    %13 = vsyncpa [#allocation4], 0
    %s14 = scalar_lea.sflag [#allocation4], 1
    %15 = vsyncpa %s14, 0
    loop: start=0, step=1, limit=4
    $region2: #{tpu_custom_call.1} parent=1 // loop_pre_header
      _
    $region3: #{tpu_custom_call.1} parent=1 // loop_header
      %s17 = sphi 0, %s21
      %p18 = scmp.ge.s32.totalorder %s17, 4
      %s24 = sphi 0, %s43
      %s25 = sphi 0, %s39
      %s26 = sphi 0, %s35
      %s27 = sphi 0, %s24
      %s28 = sphi 0, %s25
      %s29 = sphi 0, %s26
      %s30 = sphi 0, %s27
      %s31 = sphi 0, %s28
      %s32 = sphi 0, %s29
      %s50 = sphi 0, %s52
      %s53 = sphi 0, %s50
      %s54 = sphi 0, %s53
      %s70 = sphi 0, %s54
      %s80 = sphi 0, %s82
      %s83 = sphi 0, %s80
      %s84 = sphi 0, %s83
      %s100 = sphi 0, %s84
      %s108 = sphi 0, %s110
      %s111 = sphi 0, %s108
      %s112 = sphi 0, %s111
      %s128 = sphi 0, %s112
    $region4: #{tpu_custom_call.1} parent=1 // loop_header_branch
      %20 = sbr.rel (%p18) target = $region8
    $region5: #{tpu_custom_call.1} parent=1 // loop_body
      %s22 = ssub.s32 %s17, 1
      %s23 = ssub.s32 %s17, 2
      %s33 = sadd.s32 1, %s26
      %p34 = scmp.ge.s32.totalorder %s33, 1
      %s35 = scalar_select %p34, 0, %s33
      %s36 = sadd.s32 1, %s25
      %s37 = scalar_select %p34, %s36, %s25
      %p38 = scmp.ge.s32.totalorder %s37, 1
      %s39 = scalar_select %p38, 0, %s37
      %s40 = sadd.s32 1, %s24
      %s41 = scalar_select %p38, %s40, %s24
      %p42 = scmp.ge.s32.totalorder %s41, 2
      %s43 = scalar_select %p42, 0, %s41
      %s44 = sadd.s32 %s25, %s26
      %s45 = sadd.s32 %s39, %s35
      %s46 = ssub.s32 %s24, %s43
      %s47 = ssub.s32 %s44, %s45
      %s48 = sor.u32 %s46, %s47
      %p49 = scmp.eq.s32.totalorder %s48, 0
      %s51 = sadd.s32 %s50, 1
      %s52 = scalar_select %p49, %s50, %s51
      %p55 = pneg %p49
      %p56 = scmp.eq.s32.totalorder %s17, 1
      %p57 = por %p55, %p56
      %p58 = scmp.ne.s32.totalorder %s50, %s53
      %p59 = scmp.eq.s32.totalorder %s17, 0
      %p60 = por %p58, %p59
      %p61 = scmp.ne.s32.totalorder %s50, %s53
      %p62 = scmp.eq.s32.totalorder %s22, 1
      %p63 = por %p61, %p62
      %p64 = scmp.ne.s32.totalorder %s53, %s54
      %p65 = scmp.eq.s32.totalorder %s22, 0
      %p66 = por %p64, %p65
      %p67 = scmp.ne.s32.totalorder %s53, %s54
      %p68 = scmp.eq.s32.totalorder %s23, 1
      %p69 = por %p67, %p68
      %p71 = scmp.ne.s32.totalorder %s54, %s70
      %p72 = scmp.eq.s32.totalorder %s23, 0
      %p73 = por %p71, %p72
      %s74 = sadd.s32 %s25, %s26
      %s75 = sadd.s32 %s39, %s35
      %s76 = ssub.s32 %s24, %s43
      %s77 = ssub.s32 %s74, %s75
      %s78 = sor.u32 %s76, %s77
      %p79 = scmp.eq.s32.totalorder %s78, 0
      %s81 = sadd.s32 %s80, 1
      %s82 = scalar_select %p79, %s80, %s81
      %p85 = pneg %p79
      %p86 = scmp.eq.s32.totalorder %s17, 1
      %p87 = por %p85, %p86
      %p88 = scmp.ne.s32.totalorder %s80, %s83
      %p89 = scmp.eq.s32.totalorder %s17, 0
      %p90 = por %p88, %p89
      %p91 = scmp.ne.s32.totalorder %s80, %s83
      %p92 = scmp.eq.s32.totalorder %s22, 1
      %p93 = por %p91, %p92
      %p94 = scmp.ne.s32.totalorder %s83, %s84
      %p95 = scmp.eq.s32.totalorder %s22, 0
      %p96 = por %p94, %p95
      %p97 = scmp.ne.s32.totalorder %s83, %s84
      %p98 = scmp.eq.s32.totalorder %s23, 1
      %p99 = por %p97, %p98
      %p101 = scmp.ne.s32.totalorder %s84, %s100
      %p102 = scmp.eq.s32.totalorder %s23, 0
      %p103 = por %p101, %p102
      %s104 = sadd.s32 %s24, %s25
      %s105 = sadd.s32 %s43, %s39
      %s106 = ssub.s32 %s104, %s105
      %p107 = scmp.eq.s32.totalorder %s106, 0
      %s109 = sadd.s32 %s108, 1
      %s110 = scalar_select %p107, %s108, %s109
      %p113 = pneg %p107
      %p114 = scmp.eq.s32.totalorder %s17, 1
      %p115 = por %p113, %p114
      %p116 = scmp.ne.s32.totalorder %s108, %s111
      %p117 = scmp.eq.s32.totalorder %s17, 0
      %p118 = por %p116, %p117
      %p119 = scmp.ne.s32.totalorder %s108, %s111
      %p120 = scmp.eq.s32.totalorder %s22, 1
      %p121 = por %p119, %p120
      %p122 = scmp.ne.s32.totalorder %s111, %s112
      %p123 = scmp.eq.s32.totalorder %s22, 0
      %p124 = por %p122, %p123
      %p125 = scmp.ne.s32.totalorder %s111, %s112
      %p126 = scmp.eq.s32.totalorder %s23, 1
      %p127 = por %p125, %p126
      %p129 = scmp.ne.s32.totalorder %s112, %s128
      %p130 = scmp.eq.s32.totalorder %s23, 0
      %p131 = por %p129, %p130
      %p132 = scmp.le.s32.totalorder 1, %s17
      %p133 = scmp.lt.s32.totalorder %s17, 3
      %p134 = pnand %p132, %p133
      %p135 = pneg %p134
      // Predicated region
      $region9: #{tpu_custom_call.1} parent=5 // pred_check
        _
      $region10: #{tpu_custom_call.1} parent=5 // pred_check_branch
        %137 = sbr.rel (%p134) target = $region12
      $region11: #{tpu_custom_call.1} parent=5 // pred_region
        %s138 = ssub.s32 %s17, 1
      $region12: #{tpu_custom_call.1} parent=5 // pred_fallthru
        _
      %p139 = scmp.lt.s32.totalorder %s17, 2
      // Predicated region
      $region13: #{tpu_custom_call.1} parent=5 // pred_check
        %p140 = pneg %p139
      $region14: #{tpu_custom_call.1} parent=5 // pred_check_branch
        %142 = sbr.rel (%p140) target = $region16
      $region15: #{tpu_custom_call.1} parent=5 // pred_region
        // Predicated region
        $region17: #{tpu_custom_call.1} parent=15 // pred_check
          %p143 = pneg %p60
        $region18: #{tpu_custom_call.1} parent=15 // pred_check_branch
          %145 = sbr.rel (%p143) target = $region20
        $region19: #{tpu_custom_call.1} parent=15 // pred_region
          %s146 = sand.u32 %s50, 1
          %s147 = scalar_lea.sflag [#allocation3], %s146
          %s148 = sand.u32 %s50, 1
          %s149 = smul.addr %s148, 8
          %s150 = scalar_lea.vmem [#allocation2], %s149
          %s151 = sadd.s32 %s25, %s26
          %s152 = smul.u32 2, %s151
          %s154 = ssub.s32 128, 128
          %155 = vsyncadd %s147, %s154
          %s156 = smul.addr %s24, 2
          %s157 = sadd.s32 %s152, %s156
          %s158 = smul.addr %s157, 64
          %s159 = scalar_lea.hbm %s0, %s158
          %s161 = sshll.u32 %s150, 4
          %s162 = int_to_ptr.vmem [resolvable:$true] %s161
          %164 = dma.hbm_to_vmem [thread:$0]  %s159, 128, %s162, %s147
        $region20: #{tpu_custom_call.1} parent=15 // pred_fallthru
          _
        // Predicated region
        $region21: #{tpu_custom_call.1} parent=15 // pred_check
          %p165 = pneg %p90
        $region22: #{tpu_custom_call.1} parent=15 // pred_check_branch
          %167 = sbr.rel (%p165) target = $region24
        $region23: #{tpu_custom_call.1} parent=15 // pred_region
          %s168 = sand.u32 %s80, 1
          %s169 = scalar_lea.sflag [#allocation6], %s168
          %s170 = sand.u32 %s80, 1
          %s171 = smul.addr %s170, 8
          %s172 = scalar_lea.vmem [#allocation5], %s171
          %s173 = sadd.s32 %s25, %s26
          %s174 = smul.u32 2, %s173
          %s176 = ssub.s32 128, 128
          %177 = vsyncadd %s169, %s176
          %s178 = smul.addr %s24, 2
          %s179 = sadd.s32 %s174, %s178
          %s180 = smul.addr %s179, 64
          %s181 = scalar_lea.hbm %s1, %s180
          %s183 = sshll.u32 %s172, 4
          %s184 = int_to_ptr.vmem [resolvable:$true] %s183
          %186 = dma.hbm_to_vmem [thread:$0]  %s181, 128, %s184, %s169
        $region24: #{tpu_custom_call.1} parent=15 // pred_fallthru
          _
      $region16: #{tpu_custom_call.1} parent=5 // pred_fallthru
        _
      %p187 = scmp.le.s32.totalorder 1, %s17
      %p188 = scmp.lt.s32.totalorder %s17, 3
      %p189 = pnand %p187, %p188
      %p190 = pneg %p189
      // Predicated region
      $region25: #{tpu_custom_call.1} parent=5 // pred_check
        _
      $region26: #{tpu_custom_call.1} parent=5 // pred_check_branch
        %192 = sbr.rel (%p189) target = $region28
      $region27: #{tpu_custom_call.1} parent=5 // pred_region
        %s193 = ssub.s32 %s17, 1
        %s194 = sand.u32 %s53, 1
        %s195 = scalar_lea.sflag [#allocation3], %s194
        %s196 = sand.u32 %s53, 1
        %s197 = smul.addr %s196, 8
        %s198 = scalar_lea.vmem [#allocation2], %s197
        // Predicated region
        $region29: #{tpu_custom_call.1} parent=27 // pred_check
          %p199 = pneg %p66
        $region30: #{tpu_custom_call.1} parent=27 // pred_check_branch
          %201 = sbr.rel (%p199) target = $region32
        $region31: #{tpu_custom_call.1} parent=27 // pred_region
          %202 = dma.done %s195, 128
        $region32: #{tpu_custom_call.1} parent=27 // pred_fallthru
          _
        %s203 = sand.u32 %s83, 1
        %s204 = scalar_lea.sflag [#allocation6], %s203
        %s205 = sand.u32 %s83, 1
        %s206 = smul.addr %s205, 8
        %s207 = scalar_lea.vmem [#allocation5], %s206
        // Predicated region
        $region33: #{tpu_custom_call.1} parent=27 // pred_check
          %p208 = pneg %p96
        $region34: #{tpu_custom_call.1} parent=27 // pred_check_branch
          %210 = sbr.rel (%p208) target = $region36
        $region35: #{tpu_custom_call.1} parent=27 // pred_region
          %211 = dma.done %s204, 128
        $region36: #{tpu_custom_call.1} parent=27 // pred_fallthru
          _
        %s212 = sand.u32 %s53, 1
        %s213 = scalar_lea.sflag [#allocation3], %s212
        %s214 = sand.u32 %s53, 1
        %s215 = smul.addr %s214, 8
        %s216 = scalar_lea.vmem [#allocation2], %s215
        %p217 = pneg %p66
        %p218 = pneg %p63
        %s219 = sand.u32 %s83, 1
        %s220 = scalar_lea.sflag [#allocation6], %s219
        %s221 = sand.u32 %s83, 1
        %s222 = smul.addr %s221, 8
        %s223 = scalar_lea.vmem [#allocation5], %s222
        %p224 = pneg %p96
        %p225 = pneg %p93
        %p226 = pneg %p124
        %p227 = pneg %p121
        %s228 = sand.u32 %s111, 1
        %s229 = scalar_lea.sflag [#allocation4], %s228
        %s230 = sand.u32 %s111, 1
        %s231 = smul.addr %s230, 2
        %s232 = scalar_lea.vmem [#allocation7], %s231
        %s233 = sadd.s32 %s28, %s29
        %s234 = smul.u32 2, %s233
        %s235 = sadd.s32 %s28, %s29
        %s236 = smul.u32 2, %s235
        %s237 = sadd.s32 %s27, %s28
        %p238 = scmp.eq.s32.totalorder %s29, 0
        // Predicated region
        $region37: #{tpu_custom_call.1} parent=27 // pred_check
          %p239 = pneg %p238
        $region38: #{tpu_custom_call.1} parent=27 // pred_check_branch
          %241 = sbr.rel (%p239) target = $region40
        $region39: #{tpu_custom_call.1} parent=27 // pred_region
          %v242 = vlaneseq
          %vm243 = vcmp.ge.s32.totalorder %v242, 0
          %vm244 = vcmp.lt.s32.totalorder %v242, 256
          %vm245 = vmand %vm243, %vm244
          %246 = vst.msk [vmem:[%s232] sm:$0x3] %vm245, 0.0
        $region40: #{tpu_custom_call.1} parent=27 // pred_fallthru
          _
        %v247 = vld [vmem:[%s198] sm:$0xff]
        %v248 = vld [vmem:[%s207] sm:$0xff]
        %v250 = vcombine.high %v247, %v247
        %vm252 = vcmask 1043456
        %v253 = vsel %vm252, %v247, -inf
        %v254 = vrot.slane %v253, 4
        %v255 = vmax.f32 %v253, %v254
        %v256 = vrot.slane %v255, 2
        %v257 = vmax.f32 %v255, %v256
        %v258 = vrot.slane %v257, 1
        %v259 = vmax.f32 %v257, %v258
        %v260 = vsel %vm252, %v250, -inf
        %v261 = vrot.slane %v260, 4
        %v262 = vmax.f32 %v260, %v261
        %v263 = vrot.slane %v262, 2
        %v264 = vmax.f32 %v262, %v263
        %v265 = vrot.slane %v264, 1
        %v266 = vmax.f32 %v264, %v265
        %v269 = vcombine.low %v259, %v266
        %v271 = vsub.f32 %v247, %v269
        %v272 = vmul.f32 %v271, 1.442695
        %v273 = vpow.pop %v272
        %v275 = vcombine.high %v273, %v273
        %v277 = vsel %vm252, %v273, 0.0
        %v278 = vrot.slane %v277, 4
        %v279 = vadd.f32 %v277, %v278
        %v280 = vrot.slane %v279, 2
        %v281 = vadd.f32 %v279, %v280
        %v282 = vrot.slane %v281, 1
        %v283 = vadd.f32 %v281, %v282
        %v284 = vsel %vm252, %v275, 0.0
        %v285 = vrot.slane %v284, 4
        %v286 = vadd.f32 %v284, %v285
        %v287 = vrot.slane %v286, 2
        %v288 = vadd.f32 %v286, %v287
        %v289 = vrot.slane %v288, 1
        %v290 = vadd.f32 %v288, %v289
        %v291 = vlog2.pop %v283
        %v292 = vmul.f32 %v291, 0.6931472
        %v293 = vlog2.pop %v290
        %v294 = vmul.f32 %v293, 0.6931472
        %v296 = vcombine.high %v248, %v248
        %v298 = vsel %vm252, %v248, 0.0
        %v299 = vrot.slane %v298, 4
        %v300 = vadd.f32 %v298, %v299
        %v301 = vrot.slane %v300, 2
        %v302 = vadd.f32 %v300, %v301
        %v303 = vrot.slane %v302, 1
        %v304 = vadd.f32 %v302, %v303
        %v305 = vsel %vm252, %v296, 0.0
        %v306 = vrot.slane %v305, 4
        %v307 = vadd.f32 %v305, %v306
        %v308 = vrot.slane %v307, 2
        %v309 = vadd.f32 %v307, %v308
        %v310 = vrot.slane %v309, 1
        %v311 = vadd.f32 %v309, %v310
        %v312 = vmul.f32 %v248, %v247
        %v314 = vcombine.high %v312, %v312
        %v316 = vsel %vm252, %v312, 0.0
        %v317 = vrot.slane %v316, 4
        %v318 = vadd.f32 %v316, %v317
        %v319 = vrot.slane %v318, 2
        %v320 = vadd.f32 %v318, %v319
        %v321 = vrot.slane %v320, 1
        %v322 = vadd.f32 %v320, %v321
        %v323 = vsel %vm252, %v314, 0.0
        %v324 = vrot.slane %v323, 4
        %v325 = vadd.f32 %v323, %v324
        %v326 = vrot.slane %v325, 2
        %v327 = vadd.f32 %v325, %v326
        %v328 = vrot.slane %v327, 1
        %v329 = vadd.f32 %v327, %v328
        %v330 = vadd.f32 %v259, %v292
        %v331 = vadd.f32 %v266, %v294
        %v332 = vmul.f32 %v330, %v304
        %v333 = vmul.f32 %v331, %v311
        %v334 = vsub.f32 %v332, %v322
        %v335 = vsub.f32 %v333, %v329
        %v336 = vld [vmem:[%s232] sm:$0x3]
        %v339 = vcombine.low %v334, %v335
        %v341 = vunpack.c.l.s4 1966171168
        %v342 = vunpack.c.0.s8 %v341
        %v343 = vlaneseq
        %v344 = vshrl.u32 %v343, 7
        %v345 = vsub.s32 %v342, %v344
        %v346 = vrot.slane %v339, %v345
        %v348 = vunpack.c.l.s4 1966171168
        %v349 = vunpack.c.0.s8 %v348
        %v350 = vlaneseq
        %v351 = vshrl.u32 %v350, 7
        %v352 = vsub.s32 %v349, %v351
        %v353 = vrot.slane %v346, %v352
        %v355 = vadd.f32 %v336, %v353
        %v356 = vlaneseq
        %vm357 = vcmp.ge.s32.totalorder %v356, 0
        %vm358 = vcmp.lt.s32.totalorder %v356, 256
        %vm359 = vmand %vm357, %vm358
        %360 = vst.msk [vmem:[%s232] sm:$0x3] %vm359, %v355
        %s361 = sand.u32 %s111, 1
        %s362 = scalar_lea.sflag [#allocation4], %s361
        %s363 = sand.u32 %s111, 1
        %s364 = smul.addr %s363, 2
        %s365 = scalar_lea.vmem [#allocation7], %s364
        // Predicated region
        $region41: #{tpu_custom_call.1} parent=27 // pred_check
          %p366 = pneg %p121
        $region42: #{tpu_custom_call.1} parent=27 // pred_check_branch
          %368 = sbr.rel (%p366) target = $region44
        $region43: #{tpu_custom_call.1} parent=27 // pred_region
          %s369 = sadd.s32 %s27, %s28
          %s371 = ssub.s32 32, 32
          %372 = vsyncadd %s362, %s371
          %s373 = smul.addr %s369, 2
          %s374 = smul.addr %s373, 16
          %s375 = scalar_lea.hbm %s2, %s374
          %s377 = sshll.u32 %s365, 4
          %s378 = int_to_ptr.vmem [resolvable:$true] %s377
          %380 = dma.vmem_to_hbm [thread:$0]  %s378, 32, %s375, %s362
        $region44: #{tpu_custom_call.1} parent=27 // pred_fallthru
          _
      $region28: #{tpu_custom_call.1} parent=5 // pred_fallthru
        _
      %p381 = scmp.le.s32.totalorder 2, %s17
      // Predicated region
      $region45: #{tpu_custom_call.1} parent=5 // pred_check
        %p382 = pneg %p381
      $region46: #{tpu_custom_call.1} parent=5 // pred_check_branch
        %384 = sbr.rel (%p382) target = $region48
      $region47: #{tpu_custom_call.1} parent=5 // pred_region
        %s385 = ssub.s32 %s17, 2
        // Predicated region
        $region49: #{tpu_custom_call.1} parent=47 // pred_check
          %p386 = pneg %p127
        $region50: #{tpu_custom_call.1} parent=47 // pred_check_branch
          %388 = sbr.rel (%p386) target = $region52
        $region51: #{tpu_custom_call.1} parent=47 // pred_region
          %s389 = sand.u32 %s112, 1
          %s390 = scalar_lea.sflag [#allocation4], %s389
          %s391 = sand.u32 %s112, 1
          %s392 = smul.addr %s391, 2
          %s393 = scalar_lea.vmem [#allocation7], %s392
          %394 = dma.done %s390, 32
        $region52: #{tpu_custom_call.1} parent=47 // pred_fallthru
          _
      $region48: #{tpu_custom_call.1} parent=5 // pred_fallthru
        _
    $region6: #{tpu_custom_call.1} parent=1 // loop_footer
      %s21 = sadd.s32 1, %s17
    $region7: #{tpu_custom_call.1} parent=1 // loop_footer_branch
      %16 = sbr.rel target = $region3
    $region8: #{tpu_custom_call.1} parent=1 // loop_exit
      _
    %395 = vsyncpa [#allocation3], 1
    %s396 = scalar_lea.sflag [#allocation3], 1
    %397 = vsyncpa %s396, 1
    %398 = vsyncpa [#allocation6], 1
    %s399 = scalar_lea.sflag [#allocation6], 1
    %400 = vsyncpa %s399, 1
    %401 = vsyncpa [#allocation4], 1
    %s402 = scalar_lea.sflag [#allocation4], 1
    %403 = vsyncpa %s402, 1

</llo_original>
